<compile_context>
chip_gen: v7x
topology: tpu7x:2x2x1
jax: 0.10.0
libtpu: 0.0.40
codegen_flags: <defaults>
</compile_context>

<pallas_src>
import functools

import jax
import jax.numpy as jnp
from jax.experimental import pallas as pl
from jax.experimental.pallas import tpu as pltpu

_PAIRWISE_EPS = 1e-6  # matches torch.nn.functional.pairwise_distance default


def _contrastive_kernel(emb1_ref, emb2_ref, label_ref, out_ref, *,
                        margin, true_batch, tile_batch, tiles_per_core,
                        label_resident):
    c = pl.program_id(0)                    # core-shard ("parallel") axis
    t = pl.program_id(1)                    # batch-tile ("arbitrary") axis
    tile_idx = c * tiles_per_core + t       # global batch-tile index

    @pl.when(t == 0)
    def _():
        out_ref[...] = jnp.zeros_like(out_ref)

    # Cast-at-use: keep inputs in native dtype in VMEM, promote in the subtraction.
    diff = (emb1_ref[...].astype(jnp.float32)
            - emb2_ref[...].astype(jnp.float32)) + _PAIRWISE_EPS
    sq = diff * diff                                                   # (TB, D)

    # Lane-dense per-row reduction via the (idle) MXU: (1,D) . (TB,D)^T -> (1,TB)
    ones_row = jnp.ones((1, emb1_ref.shape[1]), dtype=jnp.float32)
    sq_dist = jax.lax.dot_general(
        ones_row, sq,
        dimension_numbers=(((1,), (1,)), ((), ())),
        preferred_element_type=jnp.float32)                            # (1, TB)

    dist = jnp.sqrt(sq_dist)                                           # EUP
    hinge = jnp.maximum(margin - dist, 0.0)

    if label_resident:
        # Whole label table is VMEM-resident; dynamic sublane slice -> (1, TB).
        label = label_ref[pl.ds(tile_idx, 1), :]
    else:
        label = label_ref[...]                                         # (1, TB)
    label = label.astype(jnp.float32)

    per_sample = label * sq_dist + (1.0 - label) * (hinge * hinge)     # (1, TB)

    # Mask rows added by batch padding (lane-dense compare).
    lane = jax.lax.broadcasted_iota(jnp.int32, per_sample.shape, 1)
    row = tile_idx * tile_batch + lane
    per_sample = jnp.where(row < true_batch, per_sample, 0.0)

    # Accumulate directly into the resident per-core output block.
    out_ref[...] += jnp.sum(per_sample)


def _round_up(x, m):
    return ((x + m - 1) // m) * m


def contrastive_loss(emb1, emb2, label, margin=1.0, *,
                     target_block_bytes=None, vmem_limit_bytes=None):
    """Pallas implementation of ContrastiveLoss.forward.

    emb1, emb2: (B, D) embeddings.  label: (B,), 1 = similar, 0 = dissimilar.
    Returns a scalar f32 loss.
    """
    assert emb1.shape == emb2.shape and emb1.ndim == 2
    B, D = emb1.shape
    label = jnp.asarray(label).reshape(-1)
    assert label.shape[0] == B

    itemsize = jnp.dtype(emb1.dtype).itemsize
    pack = max(8, 32 // itemsize)           # sublane packing: f32->8, bf16->16, int8->32

    # Generation-aware VMEM budget (v5e/v6e: 128 MiB physical -> 64 MiB scoped;
    # v7x: 64 MiB physical -> keep a 32 MiB cap).
    vmem_cap = 64 * 1024 * 1024
    try:
        info = pltpu.get_tpu_info()
        cap = getattr(info, "vmem_capacity_bytes", None)
        if cap:
            vmem_cap = int(cap)
    except Exception:
        pass
    if vmem_limit_bytes is None:
        vmem_limit_bytes = (64 * 1024 * 1024 if vmem_cap >= 128 * 1024 * 1024
                            else 32 * 1024 * 1024)
    if target_block_bytes is None:
        # ~4 MiB per embedding block; 2 inputs x 2 buffers = 16 MiB <= limit.
        target_block_bytes = min(4 * 1024 * 1024, vmem_limit_bytes // 8)

    # Bytes-based batch-tile sizing, rounded to the dtype's sublane packing.
    row_bytes = D * itemsize
    tb = max(pack, (int(target_block_bytes) // row_bytes) // pack * pack)
    tb = min(tb, _round_up(B, pack))

    n_tiles = pl.cdiv(B, tb)
    # Shard batch tiles across v7x's 2 TensorCores; harmless (serial) on 1-TC chips.
    num_cores = 2 if n_tiles >= 2 else 1
    tiles_per_core = pl.cdiv(n_tiles, num_cores)
    n_tiles_total = num_cores * tiles_per_core
    b_pad = n_tiles_total * tb

    if b_pad != B:
        pad = b_pad - B
        emb1 = jnp.pad(emb1, ((0, pad), (0, 0)))
        emb2 = jnp.pad(emb2, ((0, pad), (0, 0)))
        label = jnp.pad(label, ((0, pad),))
    # Lane-dense label table: one (1, tb) row per batch tile.
    label2d = label.reshape(n_tiles_total, tb).astype(jnp.float32)

    # Keep the label fully VMEM-resident unless the batch is enormous.
    label_resident = (b_pad * 4) <= 8 * 1024 * 1024
    if label_resident:
        label_spec = pl.BlockSpec((n_tiles_total, tb), lambda c, t: (0, 0))
    else:
        label_spec = pl.BlockSpec(
            (1, tb), lambda c, t, tpc=tiles_per_core: (c * tpc + t, 0))

    emb_spec = pl.BlockSpec(
        (tb, D), lambda c, t, tpc=tiles_per_core: (c * tpc + t, 0))

    kernel = functools.partial(
        _contrastive_kernel, margin=float(margin), true_batch=B,
        tile_batch=tb, tiles_per_core=tiles_per_core,
        label_resident=label_resident)

    cost = pl.CostEstimate(
        flops=int(8 * B * D),
        transcendentals=int(B),                                  # one sqrt per row
        bytes_accessed=int(2 * B * D * itemsize + B * 4 + num_cores * 4),
    )

    partials = pl.pallas_call(
        kernel,
        out_shape=jax.ShapeDtypeStruct((num_cores, 1, 1), jnp.float32),
        grid_spec=pltpu.PrefetchScalarGridSpec(
            num_scalar_prefetch=0,
            grid=(num_cores, tiles_per_core),
            in_specs=[emb_spec, emb_spec, label_spec],
            out_specs=pl.BlockSpec((1, 1, 1), lambda c, t: (c, 0, 0)),
        ),
        compiler_params=pltpu.CompilerParams(
            dimension_semantics=("parallel", "arbitrary"),
            vmem_limit_bytes=int(vmem_limit_bytes),
        ),
        cost_estimate=cost,
    )(emb1, emb2, label2d)

    # Combine per-core partial sums and apply the mean with the true batch size.
    return jnp.sum(partials) / B


def _reference(emb1, emb2, label, margin=1.0):
    dist = jnp.sqrt(jnp.sum((emb1 - emb2 + _PAIRWISE_EPS) ** 2, axis=-1))
    return jnp.mean(label * dist ** 2
                    + (1.0 - label) * jnp.maximum(margin - dist, 0.0) ** 2)


if __name__ == "__main__":
    key = jax.random.PRNGKey(0)

    # Check 1: small Siamese batch, single tile, single core-shard.
    B, D = 8, 32
    k1, k2, k3 = jax.random.split(key, 3)
    emb1 = jax.random.normal(k1, (B, D), dtype=jnp.float32)
    emb2 = jax.random.normal(k2, (B, D), dtype=jnp.float32)
    label = (jax.random.uniform(k3, (B,)) < 0.5).astype(jnp.float32)
    loss = contrastive_loss(emb1, emb2, label, margin=1.0)
    jax.block_until_ready(loss)
    ref = _reference(emb1, emb2, label, margin=1.0)
    assert jnp.allclose(loss, ref, atol=1e-5, rtol=1e-5), (loss, ref)

    # Check 2: batch not a multiple of the sublane packing (padding + mask path).
    B2 = 5
    k4, k5, k6 = jax.random.split(jax.random.PRNGKey(1), 3)
    e1 = jax.random.normal(k4, (B2, D), dtype=jnp.float32)
    e2 = jax.random.normal(k5, (B2, D), dtype=jnp.float32)
    lab = (jax.random.uniform(k6, (B2,)) < 0.5).astype(jnp.float32)
    loss2 = contrastive_loss(e1, e2, lab, margin=1.0)
    jax.block_until_ready(loss2)
    ref2 = _reference(e1, e2, lab, margin=1.0)
    assert jnp.allclose(loss2, ref2, atol=1e-5, rtol=1e-5), (loss2, ref2)

    # Check 3: many tiles + two core-shard partial sums, forced via a tiny block budget.
    B3 = 300
    k7, k8, k9 = jax.random.split(jax.random.PRNGKey(2), 3)
    e1b = jax.random.normal(k7, (B3, D), dtype=jnp.float32)
    e2b = jax.random.normal(k8, (B3, D), dtype=jnp.float32)
    lab3 = (jax.random.uniform(k9, (B3,)) < 0.5).astype(jnp.float32)
    loss3 = contrastive_loss(e1b, e2b, lab3, margin=0.75, target_block_bytes=4096)
    jax.block_until_ready(loss3)
    ref3 = _reference(e1b, e2b, lab3, margin=0.75)
    assert jnp.allclose(loss3, ref3, atol=1e-5, rtol=1e-5), (loss3, ref3)

    print("KERNEL_OK")
</pallas_src>

<mosaic_0001>
module attributes {stable_mosaic.version = 11 : i64} {
  func.func @_contrastive_kernel(%arg0: i32, %arg1: i32, %arg2: memref<8x32xf32, #tpu.memory_space<vmem>>, %arg3: memref<8x32xf32, #tpu.memory_space<vmem>>, %arg4: memref<1x8xf32, #tpu.memory_space<vmem>>, %arg5: memref<1x1x1xf32, #tpu.memory_space<vmem>>) attributes {dimension_semantics = [#tpu.dimension_semantics<parallel>, #tpu.dimension_semantics<arbitrary>], iteration_bounds = array<i64: 1, 1>, scalar_prefetch = 0 : i64, scratch_operands = 0 : i64, tpu.core_type = #tpu.core_type<tc>, window_params = [{transform_indices = @transform_0, window_bounds = array<i64: 8, 32>}, {transform_indices = @transform_1, window_bounds = array<i64: 8, 32>}, {pipeline_mode = #tpu.pipeline_mode<synchronous>, transform_indices = @transform_2, window_bounds = array<i64: 1, 8>}, {transform_indices = @transform_3, window_bounds = array<i64: 1, 1, 1>}]} {
    %c1_i32 = arith.constant 1 : i32
    %0 = arith.muli %arg0, %c1_i32 : i32
    %1 = arith.addi %0, %arg1 : i32
    %c0_i32 = arith.constant 0 : i32
    %2 = arith.cmpi eq, %arg1, %c0_i32 : i32
    %3 = arith.extui %2 : i1 to i32
    %c0_i32_0 = arith.constant 0 : i32
    %4 = arith.cmpi ne, %3, %c0_i32_0 : i32
    scf.if %4 {
      %cst_19 = arith.constant 0.000000e+00 : f32
      %42 = vector.broadcast %cst_19 : f32 to vector<1x1x1xf32>
      %c0_20 = arith.constant 0 : index
      %c0_21 = arith.constant 0 : index
      %c0_22 = arith.constant 0 : index
      %43 = vector.load %arg5[%c0_20, %c0_21, %c0_22] : memref<1x1x1xf32, #tpu.memory_space<vmem>>, vector<1x1x1xf32>
      tpu.vector_store %arg5[%c0_20, %c0_21, %c0_22], %42 {strides = array<i32>} : memref<1x1x1xf32, #tpu.memory_space<vmem>>, vector<1x1x1xf32>,
    } else {
    }
    %c0 = arith.constant 0 : index
    %c0_1 = arith.constant 0 : index
    %5 = vector.load %arg2[%c0, %c0_1] : memref<8x32xf32, #tpu.memory_space<vmem>>, vector<8x32xf32>
    %c0_2 = arith.constant 0 : index
    %c0_3 = arith.constant 0 : index
    %6 = vector.load %arg3[%c0_2, %c0_3] : memref<8x32xf32, #tpu.memory_space<vmem>>, vector<8x32xf32>
    %7 = arith.subf %5, %6 : vector<8x32xf32>
    %cst = arith.constant 9.99999997E-7 : f32
    %8 = vector.broadcast %cst : f32 to vector<8x32xf32>
    %9 = arith.addf %7, %8 : vector<8x32xf32>
    %10 = arith.mulf %9, %9 : vector<8x32xf32>
    %cst_4 = arith.constant 1.000000e+00 : f32
    %11 = vector.broadcast %cst_4 : f32 to vector<1x32xf32>
    %cst_5 = arith.constant dense<0.000000e+00> : vector<1x8xf32>
    %12 = tpu.matmul %11, %10, %cst_5 {dimension_numbers = #tpu.dot_dimension_numbers<[1], [1], [0], [0], [0, 0, 1, 0], [], []>} : vector<1x32xf32>, vector<8x32xf32>, vector<1x8xf32> -> vector<1x8xf32>
    %13 = math.sqrt %12 : vector<1x8xf32>
    %cst_6 = arith.constant 1.000000e+00 : f32
    %14 = vector.broadcast %cst_6 : f32 to vector<1x8xf32>
    %15 = arith.subf %14, %13 : vector<1x8xf32>
    %cst_7 = arith.constant 0.000000e+00 : f32
    %16 = vector.broadcast %cst_7 : f32 to vector<1x8xf32>
    %17 = arith.maximumf %15, %16 : vector<1x8xf32>
    %18 = arith.index_cast %1 : i32 to index
    %c0_8 = arith.constant 0 : index
    %19 = vector.load %arg4[%18, %c0_8] : memref<1x8xf32, #tpu.memory_space<vmem>>, vector<1x8xf32>
    %20 = arith.mulf %19, %12 : vector<1x8xf32>
    %cst_9 = arith.constant 1.000000e+00 : f32
    %21 = vector.broadcast %cst_9 : f32 to vector<1x8xf32>
    %22 = arith.subf %21, %19 : vector<1x8xf32>
    %23 = arith.mulf %17, %17 : vector<1x8xf32>
    %24 = arith.mulf %22, %23 : vector<1x8xf32>
    %25 = arith.addf %20, %24 : vector<1x8xf32>
    %26 = tpu.iota {dimensions = array<i32: 1>} : vector<1x8xi32>
    %c8_i32 = arith.constant 8 : i32
    %27 = arith.muli %1, %c8_i32 : i32
    %28 = vector.broadcast %27 : i32 to vector<1x8xi32>
    %29 = arith.addi %28, %26 : vector<1x8xi32>
    %c8_i32_10 = arith.constant 8 : i32
    %30 = vector.broadcast %c8_i32_10 : i32 to vector<1x8xi32>
    %31 = arith.cmpi slt, %29, %30 : vector<1x8xi32>
    %cst_11 = arith.constant 0.000000e+00 : f32
    %32 = vector.broadcast %cst_11 : f32 to vector<1x8xf32>
    %33 = arith.select %31, %25, %32 : vector<1x8xi1>, vector<1x8xf32>
    %c0_12 = arith.constant 0 : index
    %c0_13 = arith.constant 0 : index
    %c0_14 = arith.constant 0 : index
    %34 = vector.load %arg5[%c0_12, %c0_13, %c0_14] : memref<1x1x1xf32, #tpu.memory_space<vmem>>, vector<1x1x1xf32>
    %35 = vector.shape_cast %33 : vector<1x8xf32> to vector<1x1x8xf32>
    %cst_15 = arith.constant dense<0.000000e+00> : vector<1xf32>
    %36 = vector.multi_reduction <add>, %35, %cst_15 [1, 2] : vector<1x1x8xf32> to vector<1xf32>
    %37 = vector.shape_cast %36 : vector<1xf32> to vector<1x1x1xf32>
    %38 = vector.extract %37[0, 0, 0] : f32 from vector<1x1x1xf32>
    %39 = vector.broadcast %38 : f32 to vector<1x1x1xf32>
    %40 = arith.addf %34, %39 : vector<1x1x1xf32>
    %c0_16 = arith.constant 0 : index
    %c0_17 = arith.constant 0 : index
    %c0_18 = arith.constant 0 : index
    %41 = vector.load %arg5[%c0_16, %c0_17, %c0_18] : memref<1x1x1xf32, #tpu.memory_space<vmem>>, vector<1x1x1xf32>
    tpu.vector_store %arg5[%c0_16, %c0_17, %c0_18], %40 {strides = array<i32>} : memref<1x1x1xf32, #tpu.memory_space<vmem>>, vector<1x1x1xf32>,
    return
  }
  func.func @transform_0(%arg0: i32, %arg1: i32) -> (i32, i32) {
    %c1_i32 = arith.constant 1 : i32
    %0 = arith.muli %arg0, %c1_i32 : i32
    %1 = arith.addi %0, %arg1 : i32
    %c0_i32 = arith.constant 0 : i32
    %c0_i32_0 = arith.constant 0 : i32
    return %1, %c0_i32 : i32, i32
  }
  func.func @transform_1(%arg0: i32, %arg1: i32) -> (i32, i32) {
    %c1_i32 = arith.constant 1 : i32
    %0 = arith.muli %arg0, %c1_i32 : i32
    %1 = arith.addi %0, %arg1 : i32
    %c0_i32 = arith.constant 0 : i32
    %c0_i32_0 = arith.constant 0 : i32
    return %1, %c0_i32 : i32, i32
  }
  func.func @transform_2(%arg0: i32, %arg1: i32) -> (i32, i32) {
    %c0_i32 = arith.constant 0 : i32
    %c0_i32_0 = arith.constant 0 : i32
    %c0_i32_1 = arith.constant 0 : i32
    return %c0_i32, %c0_i32_0 : i32, i32
  }
  func.func @transform_3(%arg0: i32, %arg1: i32) -> (i32, i32, i32) {
    %c0_i32 = arith.constant 0 : i32
    %c0_i32_0 = arith.constant 0 : i32
    %c0_i32_1 = arith.constant 0 : i32
    return %arg0, %c0_i32, %c0_i32_0 : i32, i32, i32
  }
}

</mosaic_0001>

<llo_original>
// kernel: tpu_custom_call.1
$region0: #{tpu_custom_call.1}
  #allocation0 [shape = 'u32[]', space=smem, size = 0x4, offset = 0x4, fixed_abs, tag = 'smem constant byte address 0x4 - core index']
  #allocation1 [shape = 'u32[144,128]{1,0:T(1,128)}', space=vmem, size = 0x12000, scoped, tag = 'internal scratch']
  %s0 = inlined_call_operand.hbm [shape: f32[8,32], index: 0, kind: input, shape index: {}]
  %s1 = inlined_call_operand.hbm [shape: f32[8,32], index: 1, kind: input, shape index: {}]
  %s2 = inlined_call_operand.vmem [shape: f32[1,8], index: 2, kind: input, shape index: {}]
  %s3 = inlined_call_operand.hbm [shape: f32[1,1,1], index: 3, kind: output, shape index: {}]
  %s4 = sld [smem:[#allocation0]]
  $region34: #{tpu_custom_call.1} parent=0
    _
  %s6 = ssub.s32 1, %s4
  %s7 = scalar_select 0, %s6, %s4
  $region1: #{tpu_custom_call.1} parent=0
    #allocation2 [shape = 'u8[4096]{0}', space=vmem, size = 0x1000, scoped, tag = 'input window, operand 0, single buffered']
    #allocation3 [shape = 's32[1]{0}', space=sflag, size = 0x4, scoped, tag = 'scoped memory for tpu_custom_call.1']
    #allocation4 [shape = 's32[1]{0}', space=sflag, size = 0x4, scoped, tag = 'scoped memory for tpu_custom_call.1']
    #allocation5 [shape = 'u8[4096]{0}', space=vmem, size = 0x1000, scoped, tag = 'input window, operand 1, single buffered']
    #allocation6 [shape = 's32[1]{0}', space=sflag, size = 0x4, scoped, tag = 'scoped memory for tpu_custom_call.1']
    #allocation7 [shape = 'u8[512]{0}', space=vmem, size = 0x400, scoped, tag = 'output window, operand 0, single buffered']
    %8 = vsyncpa [#allocation3], 0
    %9 = vsyncpa [#allocation6], 0
    %10 = vsyncpa [#allocation4], 0
    // Predicated region
    $region2: #{tpu_custom_call.1} parent=1 // pred_check
      _
    $region3: #{tpu_custom_call.1} parent=1 // pred_check_branch
      %12 = sbr.rel (0) target = $region5
    $region4: #{tpu_custom_call.1} parent=1 // pred_region
      %s13 = sadd.s32 0, 0
      %s15 = ssub.s32 128, 128
      %16 = vsyncadd [#allocation3], %s15
      %s17 = smul.addr %s13, 128
      %s18 = scalar_lea.hbm %s0, %s17
      %s20 = sshll.u32 [#allocation2], 4
      %s21 = int_to_ptr.vmem [resolvable:$true] %s20
      %23 = dma.hbm_to_vmem [thread:$0]  %s18, 128, %s21, [#allocation3]
    $region5: #{tpu_custom_call.1} parent=1 // pred_fallthru
      _
    // Predicated region
    $region6: #{tpu_custom_call.1} parent=1 // pred_check
      _
    $region7: #{tpu_custom_call.1} parent=1 // pred_check_branch
      %25 = sbr.rel (0) target = $region9
    $region8: #{tpu_custom_call.1} parent=1 // pred_region
      %s26 = sadd.s32 0, 0
      %s28 = ssub.s32 128, 128
      %29 = vsyncadd [#allocation6], %s28
      %s30 = smul.addr %s26, 128
      %s31 = scalar_lea.hbm %s1, %s30
      %s33 = sshll.u32 [#allocation5], 4
      %s34 = int_to_ptr.vmem [resolvable:$true] %s33
      %36 = dma.hbm_to_vmem [thread:$0]  %s31, 128, %s34, [#allocation6]
    $region9: #{tpu_custom_call.1} parent=1 // pred_fallthru
      _
    // Predicated region
    $region10: #{tpu_custom_call.1} parent=1 // pred_check
      _
    $region11: #{tpu_custom_call.1} parent=1 // pred_check_branch
      %38 = sbr.rel (0) target = $region13
    $region12: #{tpu_custom_call.1} parent=1 // pred_region
      _
    $region13: #{tpu_custom_call.1} parent=1 // pred_fallthru
      _
    // Predicated region
    $region14: #{tpu_custom_call.1} parent=1 // pred_check
      _
    $region15: #{tpu_custom_call.1} parent=1 // pred_check_branch
      %40 = sbr.rel (0) target = $region17
    $region16: #{tpu_custom_call.1} parent=1 // pred_region
      %41 = dma.done [#allocation3], 128
    $region17: #{tpu_custom_call.1} parent=1 // pred_fallthru
      _
    // Predicated region
    $region18: #{tpu_custom_call.1} parent=1 // pred_check
      _
    $region19: #{tpu_custom_call.1} parent=1 // pred_check_branch
      %43 = sbr.rel (0) target = $region21
    $region20: #{tpu_custom_call.1} parent=1 // pred_region
      %44 = dma.done [#allocation6], 128
    $region21: #{tpu_custom_call.1} parent=1 // pred_fallthru
      _
    %s45 = sadd.s32 0, 0
    %s46 = sadd.s32 0, 0
    %s47 = sadd.s32 0, 0
    %p48 = scmp.eq.s32.totalorder 0, 0
    // Predicated region
    $region22: #{tpu_custom_call.1} parent=1 // pred_check
      %p49 = pneg %p48
    $region23: #{tpu_custom_call.1} parent=1 // pred_check_branch
      %51 = sbr.rel (%p49) target = $region25
    $region24: #{tpu_custom_call.1} parent=1 // pred_region
      %vm52 = vcmask 0
      %53 = vst.msk [vmem:[#allocation7] sm:$0x1] %vm52, 0.0
    $region25: #{tpu_custom_call.1} parent=1 // pred_fallthru
      _
    %v54 = vld [vmem:[#allocation2] sm:$0xff]
    %v55 = vld [vmem:[#allocation5] sm:$0xff]
    %v56 = vsub.f32 %v54, %v55
    %v57 = vadd.f32 %v56, 1e-06
    %v58 = vmul.f32 %v57, %v57
    %vm59 = vcmask 261120
    %v61 = vsel %vm59, 1.0, 0
    %v64 = vsel %vm59, %v58, 0
    %66 = vmatprep.subr.mxu0 0.0
    %67 = vmatpush1.xpose.msra.mxu0 %v64
    %68 = vmatprep.subr.mxu0 0.0
    %69 = vmatpush1.xpose.msra.mxu0 0.0
    %70 = vmatprep.subr.mxu0 0.0
    %71 = vmatpush1.xpose.msra.mxu0 0.0
    %72 = vmatprep.subr.mxu0 0.0
    %73 = vmatpush1.xpose.msra.mxu0 0.0
    %74 = vmatprep.subr.mxu0 0.0
    %75 = vmatpush1.xpose.msra.mxu0 0.0
    %76 = vmatprep.subr.mxu0 0.0
    %77 = vmatpush1.xpose.msra.mxu0 0.0
    %78 = vmatprep.subr.mxu0 0.0
    %79 = vmatpush1.xpose.msra.mxu0 0.0
    %80 = vmatprep.subr.mxu0 0.0
    %81 = vmatpush1.xpose.msra.mxu0 0.0
    %82 = vmatprep.subr.mxu0 0.0
    %83 = vmatpush1.xpose.msra.mxu0 0.0
    %84 = vmatprep.subr.mxu0 0.0
    %85 = vmatpush1.xpose.msra.mxu0 0.0
    %86 = vmatprep.subr.mxu0 0.0
    %87 = vmatpush1.xpose.msra.mxu0 0.0
    %88 = vmatprep.subr.mxu0 0.0
    %89 = vmatpush1.xpose.msra.mxu0 0.0
    %90 = vmatprep.subr.mxu0 0.0
    %91 = vmatpush1.xpose.msra.mxu0 0.0
    %92 = vmatprep.subr.mxu0 0.0
    %93 = vmatpush1.xpose.msra.mxu0 0.0
    %94 = vmatprep.subr.mxu0 0.0
    %95 = vmatpush1.xpose.msra.mxu0 0.0
    %96 = vmatprep.subr.mxu0 0.0
    %97 = vmatpush1.xpose.msra.mxu0 0.0
    %98 = vmatprep.subr.mxu0 0.0
    %99 = vmatpush1.xpose.msra.mxu0 0.0
    %100 = vmatprep.subr.mxu0 0.0
    %101 = vmatpush1.xpose.msra.mxu0 0.0
    %102 = vmatprep.subr.mxu0 0.0
    %103 = vmatpush1.xpose.msra.mxu0 0.0
    %104 = vmatprep.subr.mxu0 0.0
    %105 = vmatpush1.xpose.msra.mxu0 0.0
    %106 = vmatprep.subr.mxu0 0.0
    %107 = vmatpush1.xpose.msra.mxu0 0.0
    %108 = vmatprep.subr.mxu0 0.0
    %109 = vmatpush1.xpose.msra.mxu0 0.0
    %110 = vmatprep.subr.mxu0 0.0
    %111 = vmatpush1.xpose.msra.mxu0 0.0
    %112 = vmatprep.subr.mxu0 0.0
    %113 = vmatpush1.xpose.msra.mxu0 0.0
    %114 = vmatprep.subr.mxu0 0.0
    %115 = vmatpush1.xpose.msra.mxu0 0.0
    %116 = vmatprep.subr.mxu0 0.0
    %117 = vmatpush1.xpose.msra.mxu0 0.0
    %118 = vmatprep.subr.mxu0 0.0
    %119 = vmatpush1.xpose.msra.mxu0 0.0
    %120 = vmatprep.subr.mxu0 0.0
    %121 = vmatpush1.xpose.msra.mxu0 0.0
    %122 = vmatprep.subr.mxu0 0.0
    %123 = vmatpush1.xpose.msra.mxu0 0.0
    %124 = vmatprep.subr.mxu0 0.0
    %125 = vmatpush1.xpose.msra.mxu0 0.0
    %126 = vmatprep.subr.mxu0 0.0
    %127 = vmatpush1.xpose.msra.mxu0 0.0
    %128 = vmatprep.subr.mxu0 0.0
    %129 = vmatpush1.xpose.msra.mxu0 0.0
    %130 = vmatprep.mubr.f32.mxu0 0.0
    %131 = vmatmul.mubr.f32.gmra.mrb[0].mxu0 %v61
    %v132 = vpop.f32.mrb[0].mxu0
    %v133 = vadd.f32 0.0, %v132
    %v134 = vpop.f32.mrb[0].mxu0
    %135 = vdwg.mxu0
    %v136 = vrsqrt.pop %v133
    %v137 = vmul.f32 %v133, %v136
    %vm138 = vcmp.eq.f32.partialorder %v133, inf
    %v139 = vsel %vm138, %v133, %v137
    %vm140 = vcmp.eq.f32.partialorder %v133, 0.0
    %v141 = vand.u32 %v133, 2147483648
    %v142 = vsel %vm140, %v141, %v139
    %v143 = vsub.f32 1.0, %v142
    %v144 = vmax.f32 %v143, 0.0
    %s145 = scalar_lea.vmem %s2, %s47
    %v146 = vld [vmem:[%s145] sm:$0x1]
    %v147 = vmul.f32 %v146, %v133
    %v148 = vsub.f32 1.0, %v146
    %v149 = vmul.f32 %v144, %v144
    %v150 = vmul.f32 %v148, %v149
    %v151 = vadd.f32 %v147, %v150
    %v152 = vlaneseq
    %v153 = vand.u32 %v152, 127
    %s154 = smul.u32 %s47, 8
    %v155 = vstv %s154
    %v156 = vadd.s32 %v155, %v153
    %vm157 = vcmp.lt.s32.totalorder %v156, 8
    %v158 = vsel %vm157, %v151, 0.0
    %v159 = vld [vmem:[#allocation7] sm:$0x1]
    %vm160 = vcmask 57344
    %v161 = vsel %vm160, %v158, 0.0
    %162 = vadd.xlane.f32.xlu0 %v161
    %v163 = vpop.xlane.xlu0 %162
    %v164 = vrot.slane %v163, 4
    %v165 = vadd.f32 %v163, %v164
    %v166 = vrot.slane %v165, 2
    %v167 = vadd.f32 %v165, %v166
    %v168 = vrot.slane %v167, 1
    %v169 = vadd.f32 %v167, %v168
    %s170 = vtos %v169
    %v171 = vstv %s170
    %v172 = vadd.f32 %v159, %v171
    %vm173 = vcmask 0
    %174 = vst.msk [vmem:[#allocation7] sm:$0x1] %vm173, %v172
    // Predicated region
    $region26: #{tpu_custom_call.1} parent=1 // pred_check
      _
    $region27: #{tpu_custom_call.1} parent=1 // pred_check_branch
      %176 = sbr.rel (0) target = $region29
    $region28: #{tpu_custom_call.1} parent=1 // pred_region
      %s178 = ssub.s32 16, 16
      %179 = vsyncadd [#allocation4], %s178
      %s181 = sshll.u32 [#allocation7], 4
      %s182 = int_to_ptr.vmem [resolvable:$true] %s181
      %184 = dma.vmem_to_hbm [thread:$0]  %s182, 16, %s3, [#allocation4]
    $region29: #{tpu_custom_call.1} parent=1 // pred_fallthru
      _
    // Predicated region
    $region30: #{tpu_custom_call.1} parent=1 // pred_check
      _
    $region31: #{tpu_custom_call.1} parent=1 // pred_check_branch
      %186 = sbr.rel (0) target = $region33
    $region32: #{tpu_custom_call.1} parent=1 // pred_region
      %187 = dma.done [#allocation4], 16
    $region33: #{tpu_custom_call.1} parent=1 // pred_fallthru
      _
    %188 = vsyncpa [#allocation3], 1
    %189 = vsyncpa [#allocation6], 1
    %190 = vsyncpa [#allocation4], 1

</llo_original>
